<compile_context>
chip_gen: v7x
topology: tpu7x:2x2x1
jax: 0.10.0
libtpu: 0.0.40
codegen_flags: <defaults>
</compile_context>

<pallas_src>
import functools

import jax
import jax.numpy as jnp
from jax.experimental import pallas as pl
from jax.experimental.pallas import tpu as pltpu

LANE = 128
SUB = 8
_NEG_INF = -1e30


def _round_up(v, m):
    return (v + m - 1) // m * m


def _tpu_config():
    """Per-generation tile width / scoped-VMEM budget."""
    try:
        kind = jax.devices()[0].device_kind.lower()
    except Exception:
        kind = ""
    if ("v5" in kind) or ("v6" in kind):
        # 128 MiB physical VMEM -> big tiles (~85% of HBM roofline at 512).
        return {"vmem_limit": 96 * 1024 * 1024, "max_tile": 512}
    # v7x (64 MiB per TensorCore) or unknown: stay conservative.
    return {"vmem_limit": 48 * 1024 * 1024, "max_tile": 256}


# ---------------------------------------------------------------------------
# Kernel 1: node projection + attention logits (row-tiled, "parallel").
#   xp    = x @ W  (bf16 MXU, f32 accum, stored bf16)        [TM, H*Cp]
#   alog  = xp @ Amat (block-diagonal attn matrix, f32)       [TM, 128]
#           columns 0..H-1   -> source logits a_s
#           columns 8..8+H-1 -> target logits a_d
#   asrcT = transpose(alog)[0:8, :]  (lane-dense src logits)  [8, TM]
# ---------------------------------------------------------------------------
def _project_kernel(x_ref, w_ref, amat_ref, xp_ref, alog_ref, asrcT_ref):
    xp = jnp.dot(x_ref[...], w_ref[...], preferred_element_type=jnp.float32)
    xp_ref[...] = xp.astype(xp_ref.dtype)
    # Attention logits kept in f32 (tiny matmul) for softmax precision.
    alog = jnp.dot(xp, amat_ref[...], preferred_element_type=jnp.float32)
    alog_ref[...] = alog
    # One XLU transpose per row block; rows 0..7 hold the source logits.
    asrcT_ref[...] = jnp.transpose(alog)[0:SUB, :]


def gat_project(x, w, amat, *, tm, vmem_limit):
    n_pad, fin = x.shape
    hc = w.shape[1]
    flops = 2 * n_pad * fin * hc + 2 * n_pad * hc * LANE
    bytes_acc = (2 * n_pad * fin + 2 * fin * hc + 4 * hc * LANE
                 + 2 * n_pad * hc + 4 * (n_pad * LANE + SUB * n_pad))
    return pl.pallas_call(
        _project_kernel,
        out_shape=(
            jax.ShapeDtypeStruct((n_pad, hc), jnp.bfloat16),    # xp
            jax.ShapeDtypeStruct((n_pad, LANE), jnp.float32),   # alog (dst logits)
            jax.ShapeDtypeStruct((SUB, n_pad), jnp.float32),    # asrcT (src logits)
        ),
        grid_spec=pltpu.PrefetchScalarGridSpec(
            num_scalar_prefetch=0,
            grid=(n_pad // tm,),
            in_specs=[
                pl.BlockSpec((tm, fin), lambda i: (i, 0)),
                pl.BlockSpec((fin, hc), lambda i: (0, 0)),
                pl.BlockSpec((hc, LANE), lambda i: (0, 0)),
            ],
            out_specs=[
                pl.BlockSpec((tm, hc), lambda i: (i, 0)),
                pl.BlockSpec((tm, LANE), lambda i: (i, 0)),
                pl.BlockSpec((SUB, tm), lambda i: (0, i)),
            ],
        ),
        compiler_params=pltpu.CompilerParams(
            dimension_semantics=("parallel",),
            vmem_limit_bytes=vmem_limit),
        cost_estimate=pl.CostEstimate(flops=flops, transcendentals=0,
                                      bytes_accessed=bytes_acc),
    )(x, w, amat)


# ---------------------------------------------------------------------------
# Kernel 2: masked online softmax over source blocks + weighted aggregation.
# grid = (target-row blocks ["parallel"], source blocks ["arbitrary"]).
# ---------------------------------------------------------------------------
def _attend_kernel(alog_ref, asrcT_ref, adj_ref, xp_ref, bias_ref, out_ref,
                   m_sc, l_sc, acc_sc, *, heads, cp, concat, neg_slope,
                   apply_elu, tk, xp_resident):
    k = pl.program_id(1)

    @pl.when(k == 0)
    def _init():
        m_sc[...] = jnp.full_like(m_sc, _NEG_INF)
        l_sc[...] = jnp.zeros_like(l_sc)
        acc_sc[...] = jnp.zeros_like(acc_sc)

    # adj arrives as int8; widen to i32 so the mask already sits in 32-bit
    # layout for the f32 selects (no [TM,TK] f32 materialization).
    mask = adj_ref[...].astype(jnp.int32) > 0       # [TM, TK]
    alog = alog_ref[...]                            # [TM, 128]
    asrcT = asrcT_ref[...]                          # [8, TK]
    src0 = pl.multiple_of(k * tk, tk) if xp_resident else 0

    for h in range(heads):
        a_d = alog[:, SUB + h:SUB + h + 1]          # [TM, 1] target logits
        a_s = asrcT[h:h + 1, :]                     # [1, TK] source logits
        e0 = a_d + a_s                              # [TM, TK]
        # fused LeakyReLU + edge mask (single select chain)
        e = jnp.where(mask, jnp.where(e0 > 0, e0, neg_slope * e0), _NEG_INF)
        m_prev = m_sc[h]                            # [TM, 1]
        m_new = jnp.maximum(m_prev, jnp.max(e, axis=-1, keepdims=True))
        # exp(-1e30 - m_new) underflows to exactly 0 -> no extra `* adj` needed
        p = jnp.exp(e - m_new)                      # [TM, TK]
        corr = jnp.exp(m_prev - m_new)              # [TM, 1]
        l_sc[h] = corr * l_sc[h] + jnp.sum(p, axis=-1, keepdims=True)
        if xp_resident:
            xh = xp_ref[pl.ds(src0, tk), h * cp:(h + 1) * cp]   # [TK, Cp] bf16
        else:
            xh = xp_ref[:, h * cp:(h + 1) * cp]                 # [TK, Cp] bf16
        acc_sc[:, h * cp:(h + 1) * cp] = (
            corr * acc_sc[:, h * cp:(h + 1) * cp]
            + jnp.dot(p.astype(jnp.bfloat16), xh,
                      preferred_element_type=jnp.float32))
        m_sc[h] = m_new

    @pl.when(k == pl.num_programs(1) - 1)
    def _finalize():
        bias = bias_ref[...]
        if concat:
            # Each head written in place into its lane-aligned column slice;
            # normalization folded into the [TM, Cp] output scaling.
            for h in range(heads):
                inv = pl.reciprocal(l_sc[h], approx=True)
                res = (acc_sc[:, h * cp:(h + 1) * cp] * inv
                       + bias[:, h * cp:(h + 1) * cp])
                if apply_elu:
                    res = jnp.where(res > 0, res,
                                    jnp.exp(jnp.minimum(res, 0.0)) - 1.0)
                out_ref[:, h * cp:(h + 1) * cp] = res.astype(out_ref.dtype)
        else:
            acc = acc_sc[:, 0:cp] * pl.reciprocal(l_sc[0], approx=True)
            for h in range(1, heads):
                acc = acc + (acc_sc[:, h * cp:(h + 1) * cp]
                             * pl.reciprocal(l_sc[h], approx=True))
            res = acc * (1.0 / heads) + bias
            if apply_elu:
                res = jnp.where(res > 0, res,
                                jnp.exp(jnp.minimum(res, 0.0)) - 1.0)
            out_ref[...] = res.astype(out_ref.dtype)


def gat_attend(alog, asrcT, adj, xp, bias, *, heads, cp, concat, neg_slope,
               apply_elu, tm, tk, out_dtype, vmem_limit):
    n_pad = adj.shape[0]
    hc = heads * cp
    out_dim = hc if concat else cp

    # Keep the bf16 projected features VMEM-resident when small enough:
    # cuts xp DMA from (N/tm)*N*hc down to N*hc per kernel.
    xp_resident = (n_pad * hc * 2) <= 8 * 1024 * 1024
    if xp_resident:
        xp_spec = pl.BlockSpec((n_pad, hc), lambda i, k: (0, 0))
    else:
        xp_spec = pl.BlockSpec((tk, hc), lambda i, k: (k, 0))

    kernel = functools.partial(_attend_kernel, heads=heads, cp=cp,
                               concat=concat, neg_slope=neg_slope,
                               apply_elu=apply_elu, tk=tk,
                               xp_resident=xp_resident)
    out_itemsize = 2 if out_dtype == jnp.bfloat16 else 4
    flops = 2 * heads * n_pad * n_pad * (cp + 6)
    transc = 2 * heads * n_pad * n_pad
    bytes_acc = (n_pad * n_pad                                     # adj int8
                 + 4 * ((n_pad // tk) * n_pad * LANE + SUB * n_pad)
                 + 2 * (n_pad * hc if xp_resident
                        else (n_pad // tm) * n_pad * hc)           # xp bf16
                 + out_itemsize * n_pad * out_dim + 4 * out_dim)
    return pl.pallas_call(
        kernel,
        out_shape=jax.ShapeDtypeStruct((n_pad, out_dim), out_dtype),
        grid_spec=pltpu.PrefetchScalarGridSpec(
            num_scalar_prefetch=0,
            grid=(n_pad // tm, n_pad // tk),
            in_specs=[
                pl.BlockSpec((tm, LANE), lambda i, k: (i, 0)),      # dst logits
                pl.BlockSpec((SUB, tk), lambda i, k: (0, k)),       # src logits
                pl.BlockSpec((tm, tk), lambda i, k: (i, k)),        # adj (int8)
                xp_spec,                                            # src features (bf16)
                pl.BlockSpec((1, out_dim), lambda i, k: (0, 0)),    # bias
            ],
            out_specs=pl.BlockSpec((tm, out_dim), lambda i, k: (i, 0)),
            scratch_shapes=[
                pltpu.VMEM((heads, tm, 1), jnp.float32),   # running max
                pltpu.VMEM((heads, tm, 1), jnp.float32),   # running denom
                pltpu.VMEM((tm, hc), jnp.float32),         # running weighted sum
            ]),
        compiler_params=pltpu.CompilerParams(
            dimension_semantics=("parallel", "arbitrary"),
            vmem_limit_bytes=vmem_limit),
        cost_estimate=pl.CostEstimate(flops=flops, transcendentals=transc,
                                      bytes_accessed=bytes_acc),
    )(alog, asrcT, adj, xp, bias)


def gat_layer(x_pad, adj_pad, w_pad, amat, bias_pad, *, heads, cp, concat,
              neg_slope, apply_elu, tm, tk, out_dtype, vmem_limit):
    xp, alog, asrcT = gat_project(x_pad, w_pad, amat, tm=tm,
                                  vmem_limit=vmem_limit)
    return gat_attend(alog, asrcT, adj_pad, xp, bias_pad, heads=heads, cp=cp,
                      concat=concat, neg_slope=neg_slope, apply_elu=apply_elu,
                      tm=tm, tk=tk, out_dtype=out_dtype, vmem_limit=vmem_limit)


# ---------------------------------------------------------------------------
# Host-side padding / parameter-layout glue (pure JAX).
# ---------------------------------------------------------------------------
def _pad2(a, rows, cols):
    return jnp.zeros((rows, cols), a.dtype).at[:a.shape[0], :a.shape[1]].set(a)


def _pad_w(w, groups_in, c_in, c_in_pad, heads, c_out, c_out_pad):
    """[groups_in*c_in, heads*c_out] -> [groups_in*c_in_pad, heads*c_out_pad],
    preserving the per-group / per-head block layout used by the kernels."""
    w4 = w.reshape(groups_in, c_in, heads, c_out)
    out = jnp.zeros((groups_in, c_in_pad, heads, c_out_pad), w.dtype)
    out = out.at[:, :c_in, :, :c_out].set(w4)
    return out.reshape(groups_in * c_in_pad, heads * c_out_pad)


def _build_amat(att_src, att_dst, heads, c, cp):
    """Block-diagonal attention matrix [heads*cp, 128]:
       column h     <- att_src[h]  (source logits)
       column 8 + h <- att_dst[h]  (target logits)."""
    assert heads <= SUB, "this layout supports up to 8 heads"
    amat = jnp.zeros((heads * cp, LANE), jnp.float32)
    for h in range(heads):
        amat = amat.at[h * cp:h * cp + c, h].set(att_src[h])
        amat = amat.at[h * cp:h * cp + c, SUB + h].set(att_dst[h])
    return amat


def _pad_bias(b, heads, c, cp, concat):
    if concat:
        b2 = b.reshape(heads, c)
        out = jnp.zeros((heads, cp), b.dtype).at[:, :c].set(b2)
        return out.reshape(1, heads * cp)
    return jnp.zeros((1, cp), b.dtype).at[0, :c].set(b)


def gat_forward(x, edge_index, params, *, n_nodes, n_features, hidden, heads,
                alpha):
    n = x.shape[0]
    cfg = _tpu_config()
    # Row/source tile: largest 128-multiple that fits the budget & divides n_pad.
    tm = min(cfg["max_tile"], _round_up(n, LANE))
    n_pad = _round_up(n, tm)
    # Keep >= 2 row blocks (both v7x TensorCores busy) when it stays 128-aligned.
    if n_pad // tm == 1 and tm % (2 * LANE) == 0:
        tm //= 2
    tk = tm

    fin_pad = _round_up(n_features, LANE)
    cp1 = _round_up(hidden, LANE)
    cp2 = _round_up(n_nodes, LANE)

    # Densify edge_index -> adjacency mask adj[target, source] + self loops
    # (PyG GATConv default).  int8 = smallest O(N^2) HBM stream.
    adj = jnp.zeros((n_pad, n_pad), jnp.int8)
    adj = adj.at[edge_index[1], edge_index[0]].set(1)
    adj = adj.at[jnp.arange(n), jnp.arange(n)].set(1)

    x_pad = _pad2(x, n_pad, fin_pad).astype(jnp.bfloat16)

    # ---- layer 1: concat heads, fused ELU, bf16 output ---------------------
    w1 = _pad_w(params["w1"], 1, n_features, fin_pad, heads, hidden,
                cp1).astype(jnp.bfloat16)
    amat1 = _build_amat(params["asrc1"], params["adst1"], heads, hidden, cp1)
    b1 = _pad_bias(params["b1"], heads, hidden, cp1, concat=True)
    h1 = gat_layer(x_pad, adj, w1, amat1, b1, heads=heads, cp=cp1, concat=True,
                   neg_slope=alpha, apply_elu=True, tm=tm, tk=tk,
                   out_dtype=jnp.bfloat16, vmem_limit=cfg["vmem_limit"])

    # ---- layer 2: mean over heads, no activation, f32 output ---------------
    w2 = _pad_w(params["w2"], heads, hidden, cp1, heads, n_nodes,
                cp2).astype(jnp.bfloat16)
    amat2 = _build_amat(params["asrc2"], params["adst2"], heads, n_nodes, cp2)
    b2 = _pad_bias(params["b2"], heads, n_nodes, cp2, concat=False)
    out = gat_layer(h1, adj, w2, amat2, b2, heads=heads, cp=cp2, concat=False,
                    neg_slope=alpha, apply_elu=False, tm=tm, tk=tk,
                    out_dtype=jnp.float32, vmem_limit=cfg["vmem_limit"])
    return out[:n, :n_nodes]


def init_params(key, *, n_nodes, n_features, hidden, heads):
    ks = jax.random.split(key, 8)
    s1 = 1.0 / jnp.sqrt(jnp.float32(n_features))
    s2 = 1.0 / jnp.sqrt(jnp.float32(hidden * heads))
    return {
        "w1":    jax.random.normal(ks[0], (n_features, heads * hidden), jnp.float32) * s1,
        "asrc1": jax.random.normal(ks[1], (heads, hidden), jnp.float32) * s1,
        "adst1": jax.random.normal(ks[2], (heads, hidden), jnp.float32) * s1,
        "b1":    jnp.zeros((heads * hidden,), jnp.float32),
        "w2":    jax.random.normal(ks[3], (heads * hidden, heads * n_nodes), jnp.float32) * s2,
        "asrc2": jax.random.normal(ks[4], (heads, n_nodes), jnp.float32) * s2,
        "adst2": jax.random.normal(ks[5], (heads, n_nodes), jnp.float32) * s2,
        "b2":    jnp.zeros((n_nodes,), jnp.float32),
    }


# Pure-JAX dense f32 reference (sanity check only).
def gat_reference(x, adj, params, *, n_nodes, hidden, heads, alpha):
    def layer(xi, w, asrc, adst, b, c, concat, apply_elu):
        xp = xi @ w
        outs = []
        for h in range(heads):
            xh = xp[:, h * c:(h + 1) * c]
            a_s = xh @ asrc[h]
            a_d = xh @ adst[h]
            e = a_d[:, None] + a_s[None, :]
            e = jnp.where(e > 0, e, alpha * e)
            e = jnp.where(adj > 0, e, -jnp.inf)
            att = jax.nn.softmax(e, axis=-1)
            outs.append(att @ xh)
        out = jnp.concatenate(outs, -1) if concat else sum(outs) / heads
        out = out + b
        return jax.nn.elu(out) if apply_elu else out

    h1 = layer(x, params["w1"], params["asrc1"], params["adst1"], params["b1"],
               hidden, True, True)
    return layer(h1, params["w2"], params["asrc2"], params["adst2"],
                 params["b2"], n_nodes, False, False)


if __name__ == "__main__":
    # Small shapes consistent with GAT(n_nodes, nFeatures, nHiddenUnits, nHeads, alpha, dropout)
    N_NODES, N_FEAT, HIDDEN, HEADS = 8, 16, 8, 2
    ALPHA, DROPOUT = 0.2, 0.5  # dropout is identity in eval mode

    key = jax.random.PRNGKey(0)
    k_x, k_p = jax.random.split(key)

    # Node features: data.x -> [n_nodes, nFeatures]
    x = jax.random.normal(k_x, (N_NODES, N_FEAT), jnp.float32)

    # data.edge_index: bidirectional ring graph, shape [2, 2*N]
    src = jnp.concatenate([jnp.arange(N_NODES), (jnp.arange(N_NODES) + 1) % N_NODES])
    dst = jnp.concatenate([(jnp.arange(N_NODES) + 1) % N_NODES, jnp.arange(N_NODES)])
    edge_index = jnp.stack([src, dst])  # row 0 = source, row 1 = target

    params = init_params(k_p, n_nodes=N_NODES, n_features=N_FEAT,
                         hidden=HIDDEN, heads=HEADS)

    out = gat_forward(x, edge_index, params, n_nodes=N_NODES,
                      n_features=N_FEAT, hidden=HIDDEN, heads=HEADS,
                      alpha=ALPHA)
    out = jax.block_until_ready(out)
    assert out.shape == (N_NODES, N_NODES) and out.dtype == jnp.float32

    # Sanity check against the dense pure-JAX f32 reference (kernel path uses
    # bf16 matmul inputs, so allow a slightly wider tolerance).
    adj_ref = jnp.zeros((N_NODES, N_NODES), jnp.float32)
    adj_ref = adj_ref.at[edge_index[1], edge_index[0]].set(1.0)
    adj_ref = adj_ref.at[jnp.arange(N_NODES), jnp.arange(N_NODES)].set(1.0)
    ref = gat_reference(x, adj_ref, params, n_nodes=N_NODES, hidden=HIDDEN,
                        heads=HEADS, alpha=ALPHA)
    err = float(jnp.max(jnp.abs(out - ref)))
    assert err < 3e-2, f"max abs diff vs reference: {err}"
    print("KERNEL_OK")
</pallas_src>

<mosaic_0001>
module attributes {stable_mosaic.version = 11 : i64} {
  func.func @_project_kernel(%arg0: i32, %arg1: memref<128x128xbf16, #tpu.memory_space<vmem>>, %arg2: memref<128x256xbf16, #tpu.memory_space<vmem>>, %arg3: memref<256x128xf32, #tpu.memory_space<vmem>>, %arg4: memref<128x256xbf16, #tpu.memory_space<vmem>>, %arg5: memref<128x128xf32, #tpu.memory_space<vmem>>, %arg6: memref<8x128xf32, #tpu.memory_space<vmem>>) attributes {dimension_semantics = [#tpu.dimension_semantics<parallel>], iteration_bounds = array<i64: 1>, scalar_prefetch = 0 : i64, scratch_operands = 0 : i64, tpu.core_type = #tpu.core_type<tc>, window_params = [{transform_indices = @transform_0, window_bounds = array<i64: 128, 128>}, {pipeline_mode = #tpu.pipeline_mode<synchronous>, transform_indices = @transform_1, window_bounds = array<i64: 128, 256>}, {pipeline_mode = #tpu.pipeline_mode<synchronous>, transform_indices = @transform_2, window_bounds = array<i64: 256, 128>}, {transform_indices = @transform_3, window_bounds = array<i64: 128, 256>}, {transform_indices = @transform_4, window_bounds = array<i64: 128, 128>}, {transform_indices = @transform_5, window_bounds = array<i64: 8, 128>}]} {
    %c0 = arith.constant 0 : index
    %c0_0 = arith.constant 0 : index
    %0 = vector.load %arg1[%c0, %c0_0] : memref<128x128xbf16, #tpu.memory_space<vmem>>, vector<128x128xbf16>
    %c0_1 = arith.constant 0 : index
    %c0_2 = arith.constant 0 : index
    %1 = vector.load %arg2[%c0_1, %c0_2] : memref<128x256xbf16, #tpu.memory_space<vmem>>, vector<128x256xbf16>
    %cst = arith.constant dense<0.000000e+00> : vector<128x256xf32>
    %2 = tpu.matmul %0, %1, %cst {dimension_numbers = #tpu.dot_dimension_numbers<[1], [0], [0], [1], [0, 0, 1, 1], [], []>} : vector<128x128xbf16>, vector<128x256xbf16>, vector<128x256xf32> -> vector<128x256xf32>
    %3 = arith.truncf %2 : vector<128x256xf32> to vector<128x256xbf16>
    %c0_3 = arith.constant 0 : index
    %c0_4 = arith.constant 0 : index
    %4 = vector.load %arg4[%c0_3, %c0_4] : memref<128x256xbf16, #tpu.memory_space<vmem>>, vector<128x256xbf16>
    tpu.vector_store %arg4[%c0_3, %c0_4], %3 {strides = array<i32>} : memref<128x256xbf16, #tpu.memory_space<vmem>>, vector<128x256xbf16>,
    %c0_5 = arith.constant 0 : index
    %c0_6 = arith.constant 0 : index
    %5 = vector.load %arg3[%c0_5, %c0_6] : memref<256x128xf32, #tpu.memory_space<vmem>>, vector<256x128xf32>
    %cst_7 = arith.constant dense<0.000000e+00> : vector<128x128xf32>
    %6 = tpu.matmul %2, %5, %cst_7 {dimension_numbers = #tpu.dot_dimension_numbers<[1], [0], [0], [1], [0, 0, 1, 1], [], []>} : vector<128x256xf32>, vector<256x128xf32>, vector<128x128xf32> -> vector<128x128xf32>
    %c0_8 = arith.constant 0 : index
    %c0_9 = arith.constant 0 : index
    %7 = vector.load %arg5[%c0_8, %c0_9] : memref<128x128xf32, #tpu.memory_space<vmem>>, vector<128x128xf32>
    tpu.vector_store %arg5[%c0_8, %c0_9], %6 {strides = array<i32>} : memref<128x128xf32, #tpu.memory_space<vmem>>, vector<128x128xf32>,
    %8 = tpu.transpose %6, [1, 0] : vector<128x128xf32> -> vector<128x128xf32>
    %9 = vector.extract_strided_slice %8 {offsets = [0, 0], sizes = [8, 128], strides = [1, 1]} : vector<128x128xf32> to vector<8x128xf32>
    %c0_10 = arith.constant 0 : index
    %c0_11 = arith.constant 0 : index
    %10 = vector.load %arg6[%c0_10, %c0_11] : memref<8x128xf32, #tpu.memory_space<vmem>>, vector<8x128xf32>
    tpu.vector_store %arg6[%c0_10, %c0_11], %9 {strides = array<i32>} : memref<8x128xf32, #tpu.memory_space<vmem>>, vector<8x128xf32>,
    return
  }
  func.func @transform_0(%arg0: i32) -> (i32, i32) {
    %c0_i32 = arith.constant 0 : i32
    %c0_i32_0 = arith.constant 0 : i32
    return %arg0, %c0_i32 : i32, i32
  }
  func.func @transform_1(%arg0: i32) -> (i32, i32) {
    %c0_i32 = arith.constant 0 : i32
    %c0_i32_0 = arith.constant 0 : i32
    %c0_i32_1 = arith.constant 0 : i32
    return %c0_i32, %c0_i32_0 : i32, i32
  }
  func.func @transform_2(%arg0: i32) -> (i32, i32) {
    %c0_i32 = arith.constant 0 : i32
    %c0_i32_0 = arith.constant 0 : i32
    %c0_i32_1 = arith.constant 0 : i32
    return %c0_i32, %c0_i32_0 : i32, i32
  }
  func.func @transform_3(%arg0: i32) -> (i32, i32) {
    %c0_i32 = arith.constant 0 : i32
    %c0_i32_0 = arith.constant 0 : i32
    return %arg0, %c0_i32 : i32, i32
  }
  func.func @transform_4(%arg0: i32) -> (i32, i32) {
    %c0_i32 = arith.constant 0 : i32
    %c0_i32_0 = arith.constant 0 : i32
    return %arg0, %c0_i32 : i32, i32
  }
  func.func @transform_5(%arg0: i32) -> (i32, i32) {
    %c0_i32 = arith.constant 0 : i32
    %c0_i32_0 = arith.constant 0 : i32
    return %c0_i32, %arg0 : i32, i32
  }
}

</mosaic_0001>

<llo_original>
// kernel: tpu_custom_call.1
$region0: #{tpu_custom_call.1}
  #allocation0 [shape = 'u32[]', space=smem, size = 0x4, offset = 0x4, fixed_abs, tag = 'smem constant byte address 0x4 - core index']
  #allocation1 [shape = 'u32[144,128]{1,0:T(1,128)}', space=vmem, size = 0x12000, scoped, tag = 'internal scratch']
  %s0 = inlined_call_operand.hbm [shape: bf16[128,128], index: 0, kind: input, shape index: {}]
  %s1 = inlined_call_operand.hbm [shape: bf16[128,256], index: 1, kind: input, shape index: {}]
  %s2 = inlined_call_operand.hbm [shape: f32[256,128], index: 2, kind: input, shape index: {}]
  %s3 = inlined_call_operand.hbm [shape: bf16[128,256], index: 3, kind: output, shape index: {0}]
  %s4 = inlined_call_operand.hbm [shape: f32[128,128], index: 4, kind: output, shape index: {1}]
  %s5 = inlined_call_operand.hbm [shape: f32[8,128], index: 5, kind: output, shape index: {2}]
  %6 = xla_tuple %s3, %s4, %s5
  %s7 = sld [smem:[#allocation0]]
  $region50: #{tpu_custom_call.1} parent=0
    _
  %s9 = ssub.s32 1, %s7
  %s10 = scalar_select 0, %s9, %s7
  $region1: #{tpu_custom_call.1} parent=0
    #allocation2 [shape = 'u8[32768]{0}', space=vmem, size = 0x8000, scoped, tag = 'input window, operand 0, single buffered']
    #allocation3 [shape = 's32[1]{0}', space=sflag, size = 0x4, scoped, tag = 'scoped memory for tpu_custom_call.1']
    #allocation4 [shape = 's32[1]{0}', space=sflag, size = 0x4, scoped, tag = 'scoped memory for tpu_custom_call.1']
    #allocation5 [shape = 'u8[65536]{0}', space=vmem, size = 0x10000, scoped, tag = 'input window, operand 1, single buffered']
    #allocation6 [shape = 's32[1]{0}', space=sflag, size = 0x4, scoped, tag = 'scoped memory for tpu_custom_call.1']
    #allocation7 [shape = 'u8[131072]{0}', space=vmem, size = 0x20000, scoped, tag = 'input window, operand 2, single buffered']
    #allocation8 [shape = 'u8[65536]{0}', space=vmem, size = 0x10000, scoped, tag = 'output window, operand 0, single buffered']
    #allocation9 [shape = 'u8[65536]{0}', space=vmem, size = 0x10000, scoped, tag = 'output window, operand 1, single buffered']
    #allocation10 [shape = 's32[1]{0}', space=sflag, size = 0x4, scoped, tag = 'scoped memory for tpu_custom_call.1']
    #allocation11 [shape = 'u8[4096]{0}', space=vmem, size = 0x1000, scoped, tag = 'output window, operand 2, single buffered']
    %11 = vsyncpa [#allocation3], 0
    %12 = vsyncpa [#allocation6], 0
    %13 = vsyncpa [#allocation4], 0
    %14 = vsyncpa [#allocation10], 0
    // Predicated region
    $region2: #{tpu_custom_call.1} parent=1 // pred_check
      _
    $region3: #{tpu_custom_call.1} parent=1 // pred_check_branch
      %16 = sbr.rel (0) target = $region5
    $region4: #{tpu_custom_call.1} parent=1 // pred_region
      %s18 = ssub.s32 1024, 1024
      %19 = vsyncadd [#allocation3], %s18
      %s20 = sshll.u32 [#allocation2], 4
      %s21 = int_to_ptr.vmem [resolvable:$true] %s20
      %26 = dma.hbm_to_vmem [thread:$0]  %s0, 1024, %s21, [#allocation3], 64, 64, 4
    $region5: #{tpu_custom_call.1} parent=1 // pred_fallthru
      _
    // Predicated region
    $region6: #{tpu_custom_call.1} parent=1 // pred_check
      _
    $region7: #{tpu_custom_call.1} parent=1 // pred_check_branch
      %28 = sbr.rel (0) target = $region9
    $region8: #{tpu_custom_call.1} parent=1 // pred_region
      %s30 = ssub.s32 2048, 2048
      %31 = vsyncadd [#allocation6], %s30
      %s32 = sshll.u32 [#allocation5], 4
      %s33 = int_to_ptr.vmem [resolvable:$true] %s32
      %38 = dma.hbm_to_vmem [thread:$0]  %s1, 2048, %s33, [#allocation6], 128, 128, 8
    $region9: #{tpu_custom_call.1} parent=1 // pred_fallthru
      _
    // Predicated region
    $region10: #{tpu_custom_call.1} parent=1 // pred_check
      _
    $region11: #{tpu_custom_call.1} parent=1 // pred_check_branch
      %40 = sbr.rel (0) target = $region13
    $region12: #{tpu_custom_call.1} parent=1 // pred_region
      %s42 = ssub.s32 4096, 4096
      %43 = vsyncadd [#allocation6], %s42
      %s44 = sshll.u32 [#allocation7], 4
      %s45 = int_to_ptr.vmem [resolvable:$true] %s44
      %50 = dma.hbm_to_vmem [thread:$0]  %s2, 4096, %s45, [#allocation6], 128, 128, 8
    $region13: #{tpu_custom_call.1} parent=1 // pred_fallthru
      _
    // Predicated region
    $region14: #{tpu_custom_call.1} parent=1 // pred_check
      _
    $region15: #{tpu_custom_call.1} parent=1 // pred_check_branch
      %52 = sbr.rel (0) target = $region17
    $region16: #{tpu_custom_call.1} parent=1 // pred_region
      %53 = dma.done [#allocation3], 1024
    $region17: #{tpu_custom_call.1} parent=1 // pred_fallthru
      _
    // Predicated region
    $region18: #{tpu_custom_call.1} parent=1 // pred_check
      _
    $region19: #{tpu_custom_call.1} parent=1 // pred_check_branch
      %55 = sbr.rel (0) target = $region21
    $region20: #{tpu_custom_call.1} parent=1 // pred_region
      %56 = dma.done [#allocation6], 2048
    $region21: #{tpu_custom_call.1} parent=1 // pred_fallthru
      _
    // Predicated region
    $region22: #{tpu_custom_call.1} parent=1 // pred_check
      _
    $region23: #{tpu_custom_call.1} parent=1 // pred_check_branch
      %58 = sbr.rel (0) target = $region25
    $region24: #{tpu_custom_call.1} parent=1 // pred_region
      %59 = dma.done [#allocation6], 4096
    $region25: #{tpu_custom_call.1} parent=1 // pred_fallthru
      _
    %v61 = vld [vmem:[#allocation2] sm:$0xf]
    %v62 = vld [vmem:[#allocation2 + $0x4] sm:$0xf]
    %v63 = vld [vmem:[#allocation2 + $0x8] sm:$0xf]
    %v64 = vld [vmem:[#allocation2 + $0xc] sm:$0xf]
    %v65 = vld [vmem:[#allocation2 + $0x10] sm:$0xf]
    %v66 = vld [vmem:[#allocation2 + $0x14] sm:$0xf]
    %v67 = vld [vmem:[#allocation2 + $0x18] sm:$0xf]
    %v68 = vld [vmem:[#allocation2 + $0x1c] sm:$0xf]
    %v69 = vld [vmem:[#allocation2 + $0x20] sm:$0xf]
    %v70 = vld [vmem:[#allocation2 + $0x24] sm:$0xf]
    %v71 = vld [vmem:[#allocation2 + $0x28] sm:$0xf]
    %v72 = vld [vmem:[#allocation2 + $0x2c] sm:$0xf]
    %v73 = vld [vmem:[#allocation2 + $0x30] sm:$0xf]
    %v74 = vld [vmem:[#allocation2 + $0x34] sm:$0xf]
    %v75 = vld [vmem:[#allocation2 + $0x38] sm:$0xf]
    %v76 = vld [vmem:[#allocation2 + $0x3c] sm:$0xf]
    %v77 = vld [vmem:[#allocation5] sm:$0xff]
    %v78 = vld [vmem:[#allocation5 + $0x8] sm:$0xff]
    %v79 = vld [vmem:[#allocation5 + $0x10] sm:$0xff]
    %v80 = vld [vmem:[#allocation5 + $0x18] sm:$0xff]
    %v81 = vld [vmem:[#allocation5 + $0x20] sm:$0xff]
    %v82 = vld [vmem:[#allocation5 + $0x28] sm:$0xff]
    %v83 = vld [vmem:[#allocation5 + $0x30] sm:$0xff]
    %v84 = vld [vmem:[#allocation5 + $0x38] sm:$0xff]
    %v85 = vld [vmem:[#allocation5 + $0x40] sm:$0xff]
    %v86 = vld [vmem:[#allocation5 + $0x48] sm:$0xff]
    %v87 = vld [vmem:[#allocation5 + $0x50] sm:$0xff]
    %v88 = vld [vmem:[#allocation5 + $0x58] sm:$0xff]
    %v89 = vld [vmem:[#allocation5 + $0x60] sm:$0xff]
    %v90 = vld [vmem:[#allocation5 + $0x68] sm:$0xff]
    %v91 = vld [vmem:[#allocation5 + $0x70] sm:$0xff]
    %v92 = vld [vmem:[#allocation5 + $0x78] sm:$0xff]
    %v109 = vunpack.c.l.b16 %v61
    %v110 = vunpack.c.l.b16 %v62
    %v111 = vunpack.c.l.b16 %v63
    %v112 = vunpack.c.l.b16 %v64
    %v113 = vunpack.c.l.b16 %v65
    %v114 = vunpack.c.l.b16 %v66
    %v115 = vunpack.c.l.b16 %v67
    %v116 = vunpack.c.l.b16 %v68
    %v117 = vunpack.c.l.b16 %v69
    %v118 = vunpack.c.l.b16 %v70
    %v119 = vunpack.c.l.b16 %v71
    %v120 = vunpack.c.l.b16 %v72
    %v121 = vunpack.c.l.b16 %v73
    %v122 = vunpack.c.l.b16 %v74
    %v123 = vunpack.c.l.b16 %v75
    %v124 = vunpack.c.l.b16 %v76
    %v125 = vpack.c.b16 %v110, %v109
    %v126 = vpack.c.b16 %v112, %v111
    %v127 = vpack.c.b16 %v114, %v113
    %v128 = vpack.c.b16 %v116, %v115
    %v129 = vpack.c.b16 %v118, %v117
    %v130 = vpack.c.b16 %v120, %v119
    %v131 = vpack.c.b16 %v122, %v121
    %v132 = vpack.c.b16 %v124, %v123
    %v157 = vunpack.c.l.b16 %v77
    %v158 = vunpack.c.h.b16 %v77
    %v159 = vunpack.c.l.b16 %v78
    %v160 = vunpack.c.h.b16 %v78
    %v161 = vunpack.c.l.b16 %v79
    %v162 = vunpack.c.h.b16 %v79
    %v163 = vunpack.c.l.b16 %v80
    %v164 = vunpack.c.h.b16 %v80
    %v165 = vunpack.c.l.b16 %v81
    %v166 = vunpack.c.h.b16 %v81
    %v167 = vunpack.c.l.b16 %v82
    %v168 = vunpack.c.h.b16 %v82
    %v169 = vunpack.c.l.b16 %v83
    %v170 = vunpack.c.h.b16 %v83
    %v171 = vunpack.c.l.b16 %v84
    %v172 = vunpack.c.h.b16 %v84
    %v173 = vunpack.c.l.b16 %v85
    %v174 = vunpack.c.h.b16 %v85
    %v175 = vunpack.c.l.b16 %v86
    %v176 = vunpack.c.h.b16 %v86
    %v177 = vunpack.c.l.b16 %v87
    %v178 = vunpack.c.h.b16 %v87
    %v179 = vunpack.c.l.b16 %v88
    %v180 = vunpack.c.h.b16 %v88
    %v181 = vunpack.c.l.b16 %v89
    %v182 = vunpack.c.h.b16 %v89
    %v183 = vunpack.c.l.b16 %v90
    %v184 = vunpack.c.h.b16 %v90
    %v185 = vunpack.c.l.b16 %v91
    %v186 = vunpack.c.h.b16 %v91
    %v187 = vunpack.c.l.b16 %v92
    %v188 = vunpack.c.h.b16 %v92
    %v189 = vpack.c.b16 %v159, %v157
    %v190 = vpack.c.b16 %v160, %v158
    %v191 = vpack.c.b16 %v163, %v161
    %v192 = vpack.c.b16 %v164, %v162
    %v193 = vpack.c.b16 %v167, %v165
    %v194 = vpack.c.b16 %v168, %v166
    %v195 = vpack.c.b16 %v171, %v169
    %v196 = vpack.c.b16 %v172, %v170
    %v197 = vpack.c.b16 %v175, %v173
    %v198 = vpack.c.b16 %v176, %v174
    %v199 = vpack.c.b16 %v179, %v177
    %v200 = vpack.c.b16 %v180, %v178
    %v201 = vpack.c.b16 %v183, %v181
    %v202 = vpack.c.b16 %v184, %v182
    %v203 = vpack.c.b16 %v187, %v185
    %v204 = vpack.c.b16 %v188, %v186
    %221 = vmatprep.subr.bf16.mxu0 %v190
    %222 = vmatpush1.bf16.msra.mxu0 %v189
    %223 = vmatprep.subr.bf16.mxu0 %v192
    %224 = vmatpush1.bf16.msra.mxu0 %v191
    %225 = vmatprep.subr.bf16.mxu0 %v194
    %226 = vmatpush1.bf16.msra.mxu0 %v193
    %227 = vmatprep.subr.bf16.mxu0 %v196
    %228 = vmatpush1.bf16.msra.mxu0 %v195
    %229 = vmatprep.subr.bf16.mxu0 %v198
    %230 = vmatpush1.bf16.msra.mxu0 %v197
    %231 = vmatprep.subr.bf16.mxu0 %v200
    %232 = vmatpush1.bf16.msra.mxu0 %v199
    %233 = vmatprep.subr.bf16.mxu0 %v202
    %234 = vmatpush1.bf16.msra.mxu0 %v201
    %235 = vmatprep.subr.bf16.mxu0 %v204
    %236 = vmatpush1.bf16.msra.mxu0 %v203
    %237 = vmatprep.subr.bf16.mxu0 0
    %238 = vmatpush1.bf16.msra.mxu0 0
    %239 = vmatprep.subr.bf16.mxu0 0
    %240 = vmatpush1.bf16.msra.mxu0 0
    %241 = vmatprep.subr.bf16.mxu0 0
    %242 = vmatpush1.bf16.msra.mxu0 0
    %243 = vmatprep.subr.bf16.mxu0 0
    %244 = vmatpush1.bf16.msra.mxu0 0
    %245 = vmatprep.subr.bf16.mxu0 0
    %246 = vmatpush1.bf16.msra.mxu0 0
    %247 = vmatprep.subr.bf16.mxu0 0
    %248 = vmatpush1.bf16.msra.mxu0 0
    %249 = vmatprep.subr.bf16.mxu0 0
    %250 = vmatpush1.bf16.msra.mxu0 0
    %251 = vmatprep.subr.bf16.mxu0 0
    %252 = vmatpush1.bf16.msra.mxu0 0
    %253 = vmatprep.mubr.bf16.mxu0 0
    %254 = vmatmul.mubr.bf16.gmra.mrb[0].mxu0 %v125
    %v255 = vpop.f32.mrb[0].mxu0
    %v256 = vadd.f32 0.0, %v255
    %v257 = vpop.f32.mrb[0].mxu0
    %v258 = vadd.f32 0.0, %v257
    %v259 = vpop.f32.mrb[0].mxu0
    %v260 = vadd.f32 0.0, %v259
    %v261 = vpop.f32.mrb[0].mxu0
    %v262 = vadd.f32 0.0, %v261
    %263 = vmatprep.mubr.bf16.mxu0 0
    %264 = vmatmul.mubr.bf16.gmra.mrb[0].mxu0 %v126
    %v265 = vpop.f32.mrb[0].mxu0
    %v266 = vadd.f32 0.0, %v265
    %v267 = vpop.f32.mrb[0].mxu0
    %v268 = vadd.f32 0.0, %v267
    %v269 = vpop.f32.mrb[0].mxu0
    %v270 = vadd.f32 0.0, %v269
    %v271 = vpop.f32.mrb[0].mxu0
    %v272 = vadd.f32 0.0, %v271
    %273 = vmatprep.mubr.bf16.mxu0 0
    %274 = vmatmul.mubr.bf16.gmra.mrb[0].mxu0 %v127
    %v275 = vpop.f32.mrb[0].mxu0
    %v276 = vadd.f32 0.0, %v275
    %v277 = vpop.f32.mrb[0].mxu0
    %v278 = vadd.f32 0.0, %v277
    %v279 = vpop.f32.mrb[0].mxu0
    %v280 = vadd.f32 0.0, %v279
    %v281 = vpop.f32.mrb[0].mxu0
    %v282 = vadd.f32 0.0, %v281
    %283 = vmatprep.mubr.bf16.mxu0 0
    %284 = vmatmul.mubr.bf16.gmra.mrb[0].mxu0 %v128
    %v285 = vpop.f32.mrb[0].mxu0
    %v286 = vadd.f32 0.0, %v285
    %v287 = vpop.f32.mrb[0].mxu0
    %v288 = vadd.f32 0.0, %v287
    %v289 = vpop.f32.mrb[0].mxu0
    %v290 = vadd.f32 0.0, %v289
    %v291 = vpop.f32.mrb[0].mxu0
    %v292 = vadd.f32 0.0, %v291
    %293 = vmatprep.mubr.bf16.mxu0 0
    %294 = vmatmul.mubr.bf16.gmra.mrb[0].mxu0 %v129
    %v295 = vpop.f32.mrb[0].mxu0
    %v296 = vadd.f32 0.0, %v295
    %v297 = vpop.f32.mrb[0].mxu0
    %v298 = vadd.f32 0.0, %v297
    %v299 = vpop.f32.mrb[0].mxu0
    %v300 = vadd.f32 0.0, %v299
    %v301 = vpop.f32.mrb[0].mxu0
    %v302 = vadd.f32 0.0, %v301
    %303 = vmatprep.mubr.bf16.mxu0 0
    %304 = vmatmul.mubr.bf16.gmra.mrb[0].mxu0 %v130
    %v305 = vpop.f32.mrb[0].mxu0
    %v306 = vadd.f32 0.0, %v305
    %v307 = vpop.f32.mrb[0].mxu0
    %v308 = vadd.f32 0.0, %v307
    %v309 = vpop.f32.mrb[0].mxu0
    %v310 = vadd.f32 0.0, %v309
    %v311 = vpop.f32.mrb[0].mxu0
    %v312 = vadd.f32 0.0, %v311
    %313 = vmatprep.mubr.bf16.mxu0 0
    %314 = vmatmul.mubr.bf16.gmra.mrb[0].mxu0 %v131
    %v315 = vpop.f32.mrb[0].mxu0
    %v316 = vadd.f32 0.0, %v315
    %v317 = vpop.f32.mrb[0].mxu0
    %v318 = vadd.f32 0.0, %v317
    %v319 = vpop.f32.mrb[0].mxu0
    %v320 = vadd.f32 0.0, %v319
    %v321 = vpop.f32.mrb[0].mxu0
    %v322 = vadd.f32 0.0, %v321
    %323 = vmatprep.mubr.bf16.mxu0 0
    %324 = vmatmul.mubr.bf16.gmra.mrb[0].mxu0 %v132
    %v325 = vpop.f32.mrb[0].mxu0
    %v326 = vadd.f32 0.0, %v325
    %v327 = vpop.f32.mrb[0].mxu0
    %v328 = vadd.f32 0.0, %v327
    %v329 = vpop.f32.mrb[0].mxu0
    %v330 = vadd.f32 0.0, %v329
    %v331 = vpop.f32.mrb[0].mxu0
    %v332 = vadd.f32 0.0, %v331
    %333 = vdwg.mxu0
    %v334 = vpack.c.bf16 %v260, %v256
    %v335 = vpack.c.bf16 %v262, %v258
    %v336 = vpack.c.bf16 %v270, %v266
    %v337 = vpack.c.bf16 %v272, %v268
    %v338 = vpack.c.bf16 %v280, %v276
    %v339 = vpack.c.bf16 %v282, %v278
    %v340 = vpack.c.bf16 %v290, %v286
    %v341 = vpack.c.bf16 %v292, %v288
    %v342 = vpack.c.bf16 %v300, %v296
    %v343 = vpack.c.bf16 %v302, %v298
    %v344 = vpack.c.bf16 %v310, %v306
    %v345 = vpack.c.bf16 %v312, %v308
    %v346 = vpack.c.bf16 %v320, %v316
    %v347 = vpack.c.bf16 %v322, %v318
    %v348 = vpack.c.bf16 %v330, %v326
    %v349 = vpack.c.bf16 %v332, %v328
    %v366 = vunpack.c.l.b16 %v334
    %v367 = vunpack.c.l.b16 %v335
    %v368 = vunpack.c.h.b16 %v334
    %v369 = vunpack.c.h.b16 %v335
    %v370 = vunpack.c.l.b16 %v336
    %v371 = vunpack.c.l.b16 %v337
    %v372 = vunpack.c.h.b16 %v336
    %v373 = vunpack.c.h.b16 %v337
    %v374 = vunpack.c.l.b16 %v338
    %v375 = vunpack.c.l.b16 %v339
    %v376 = vunpack.c.h.b16 %v338
    %v377 = vunpack.c.h.b16 %v339
    %v378 = vunpack.c.l.b16 %v340
    %v379 = vunpack.c.l.b16 %v341
    %v380 = vunpack.c.h.b16 %v340
    %v381 = vunpack.c.h.b16 %v341
    %v382 = vunpack.c.l.b16 %v342
    %v383 = vunpack.c.l.b16 %v343
    %v384 = vunpack.c.h.b16 %v342
    %v385 = vunpack.c.h.b16 %v343
    %v386 = vunpack.c.l.b16 %v344
    %v387 = vunpack.c.l.b16 %v345
    %v388 = vunpack.c.h.b16 %v344
    %v389 = vunpack.c.h.b16 %v345
    %v390 = vunpack.c.l.b16 %v346
    %v391 = vunpack.c.l.b16 %v347
    %v392 = vunpack.c.h.b16 %v346
    %v393 = vunpack.c.h.b16 %v347
    %v394 = vunpack.c.l.b16 %v348
    %v395 = vunpack.c.l.b16 %v349
    %v396 = vunpack.c.h.b16 %v348
    %v397 = vunpack.c.h.b16 %v349
    %v398 = vpack.c.b16 %v367, %v366
    %v399 = vpack.c.b16 %v369, %v368
    %v400 = vpack.c.b16 %v371, %v370
    %v401 = vpack.c.b16 %v373, %v372
    %v402 = vpack.c.b16 %v375, %v374
    %v403 = vpack.c.b16 %v377, %v376
    %v404 = vpack.c.b16 %v379, %v378
    %v405 = vpack.c.b16 %v381, %v380
    %v406 = vpack.c.b16 %v383, %v382
    %v407 = vpack.c.b16 %v385, %v384
    %v408 = vpack.c.b16 %v387, %v386
    %v409 = vpack.c.b16 %v389, %v388
    %v410 = vpack.c.b16 %v391, %v390
    %v411 = vpack.c.b16 %v393, %v392
    %v412 = vpack.c.b16 %v395, %v394
    %v413 = vpack.c.b16 %v397, %v396
    %430 = vst [vmem:[#allocation8] sm:$0xff] %v398
    %431 = vst [vmem:[#allocation8 + $0x8] sm:$0xff] %v399
    %432 = vst [vmem:[#allocation8 + $0x10] sm:$0xff] %v400
    %433 = vst [vmem:[#allocation8 + $0x18] sm:$0xff] %v401
    %434 = vst [vmem:[#allocation8 + $0x20] sm:$0xff] %v402
    %435 = vst [vmem:[#allocation8 + $0x28] sm:$0xff] %v403
    %436 = vst [vmem:[#allocation8 + $0x30] sm:$0xff] %v404
    %437 = vst [vmem:[#allocation8 + $0x38] sm:$0xff] %v405
    %438 = vst [vmem:[#allocation8 + $0x40] sm:$0xff] %v406
    %439 = vst [vmem:[#allocation8 + $0x48] sm:$0xff] %v407
    %440 = vst [vmem:[#allocation8 + $0x50] sm:$0xff] %v408
    %441 = vst [vmem:[#allocation8 + $0x58] sm:$0xff] %v409
    %442 = vst [vmem:[#allocation8 + $0x60] sm:$0xff] %v410
    %443 = vst [vmem:[#allocation8 + $0x68] sm:$0xff] %v411
    %444 = vst [vmem:[#allocation8 + $0x70] sm:$0xff] %v412
    %445 = vst [vmem:[#allocation8 + $0x78] sm:$0xff] %v413
    %v446 = vld [vmem:[#allocation7] sm:$0xff]
    %v447 = vld [vmem:[#allocation7 + $0x8] sm:$0xff]
    %v448 = vld [vmem:[#allocation7 + $0x10] sm:$0xff]
    %v449 = vld [vmem:[#allocation7 + $0x18] sm:$0xff]
    %v450 = vld [vmem:[#allocation7 + $0x20] sm:$0xff]
    %v451 = vld [vmem:[#allocation7 + $0x28] sm:$0xff]
    %v452 = vld [vmem:[#allocation7 + $0x30] sm:$0xff]
    %v453 = vld [vmem:[#allocation7 + $0x38] sm:$0xff]
    %v454 = vld [vmem:[#allocation7 + $0x40] sm:$0xff]
    %v455 = vld [vmem:[#allocation7 + $0x48] sm:$0xff]
    %v456 = vld [vmem:[#allocation7 + $0x50] sm:$0xff]
    %v457 = vld [vmem:[#allocation7 + $0x58] sm:$0xff]
    %v458 = vld [vmem:[#allocation7 + $0x60] sm:$0xff]
    %v459 = vld [vmem:[#allocation7 + $0x68] sm:$0xff]
    %v460 = vld [vmem:[#allocation7 + $0x70] sm:$0xff]
    %v461 = vld [vmem:[#allocation7 + $0x78] sm:$0xff]
    %v462 = vld [vmem:[#allocation7 + $0x80] sm:$0xff]
    %v463 = vld [vmem:[#allocation7 + $0x88] sm:$0xff]
    %v464 = vld [vmem:[#allocation7 + $0x90] sm:$0xff]
    %v465 = vld [vmem:[#allocation7 + $0x98] sm:$0xff]
    %v466 = vld [vmem:[#allocation7 + $0xa0] sm:$0xff]
    %v467 = vld [vmem:[#allocation7 + $0xa8] sm:$0xff]
    %v468 = vld [vmem:[#allocation7 + $0xb0] sm:$0xff]
    %v469 = vld [vmem:[#allocation7 + $0xb8] sm:$0xff]
    %v470 = vld [vmem:[#allocation7 + $0xc0] sm:$0xff]
    %v471 = vld [vmem:[#allocation7 + $0xc8] sm:$0xff]
    %v472 = vld [vmem:[#allocation7 + $0xd0] sm:$0xff]
    %v473 = vld [vmem:[#allocation7 + $0xd8] sm:$0xff]
    %v474 = vld [vmem:[#allocation7 + $0xe0] sm:$0xff]
    %v475 = vld [vmem:[#allocation7 + $0xe8] sm:$0xff]
    %v476 = vld [vmem:[#allocation7 + $0xf0] sm:$0xff]
    %v477 = vld [vmem:[#allocation7 + $0xf8] sm:$0xff]
    %478 = vmatprep.subr.mxu0 0.0
    %479 = vmatpush1.msra.mxu0 %v446
    %480 = vmatprep.subr.mxu0 0.0
    %481 = vmatpush1.msra.mxu0 %v447
    %482 = vmatprep.subr.mxu0 0.0
    %483 = vmatpush1.msra.mxu0 %v448
    %484 = vmatprep.subr.mxu0 0.0
    %485 = vmatpush1.msra.mxu0 %v449
    %486 = vmatprep.subr.mxu0 0.0
    %487 = vmatpush1.msra.mxu0 %v450
    %488 = vmatprep.subr.mxu0 0.0
    %489 = vmatpush1.msra.mxu0 %v451
    %490 = vmatprep.subr.mxu0 0.0
    %491 = vmatpush1.msra.mxu0 %v452
    %492 = vmatprep.subr.mxu0 0.0
    %493 = vmatpush1.msra.mxu0 %v453
    %494 = vmatprep.subr.mxu0 0.0
    %495 = vmatpush1.msra.mxu0 %v454
    %496 = vmatprep.subr.mxu0 0.0
    %497 = vmatpush1.msra.mxu0 %v455
    %498 = vmatprep.subr.mxu0 0.0
    %499 = vmatpush1.msra.mxu0 %v456
    %500 = vmatprep.subr.mxu0 0.0
    %501 = vmatpush1.msra.mxu0 %v457
    %502 = vmatprep.subr.mxu0 0.0
    %503 = vmatpush1.msra.mxu0 %v458
    %504 = vmatprep.subr.mxu0 0.0
    %505 = vmatpush1.msra.mxu0 %v459
    %506 = vmatprep.subr.mxu0 0.0
    %507 = vmatpush1.msra.mxu0 %v460
    %508 = vmatprep.subr.mxu0 0.0
    %509 = vmatpush1.msra.mxu0 %v461
    %510 = vmatprep.subr.mxu0 0.0
    %511 = vmatpush1.msra.mxu0 %v462
    %512 = vmatprep.subr.mxu0 0.0
    %513 = vmatpush1.msra.mxu0 %v463
    %514 = vmatprep.subr.mxu0 0.0
    %515 = vmatpush1.msra.mxu0 %v464
    %516 = vmatprep.subr.mxu0 0.0
    %517 = vmatpush1.msra.mxu0 %v465
    %518 = vmatprep.subr.mxu0 0.0
    %519 = vmatpush1.msra.mxu0 %v466
    %520 = vmatprep.subr.mxu0 0.0
    %521 = vmatpush1.msra.mxu0 %v467
    %522 = vmatprep.subr.mxu0 0.0
    %523 = vmatpush1.msra.mxu0 %v468
    %524 = vmatprep.subr.mxu0 0.0
    %525 = vmatpush1.msra.mxu0 %v469
    %526 = vmatprep.subr.mxu0 0.0
    %527 = vmatpush1.msra.mxu0 %v470
    %528 = vmatprep.subr.mxu0 0.0
    %529 = vmatpush1.msra.mxu0 %v471
    %530 = vmatprep.subr.mxu0 0.0
    %531 = vmatpush1.msra.mxu0 %v472
    %532 = vmatprep.subr.mxu0 0.0
    %533 = vmatpush1.msra.mxu0 %v473
    %534 = vmatprep.subr.mxu0 0.0
    %535 = vmatpush1.msra.mxu0 %v474
    %536 = vmatprep.subr.mxu0 0.0
    %537 = vmatpush1.msra.mxu0 %v475
    %538 = vmatprep.subr.mxu0 0.0
    %539 = vmatpush1.msra.mxu0 %v476
    %540 = vmatprep.subr.mxu0 0.0
    %541 = vmatpush1.msra.mxu0 %v477
    %542 = vmatprep.mubr.f32.mxu0 %v258
    %543 = vmatmul.mubr.f32.gmra.mrb[0].mxu0 %v256
    %v544 = vpop.f32.mrb[0].mxu0
    %v545 = vadd.f32 0.0, %v544
    %v546 = vpop.f32.mrb[0].mxu0
    %547 = vmatprep.mubr.f32.mxu0 %v262
    %548 = vmatmul.mubr.f32.gmra.mrb[0].mxu0 %v260
    %v549 = vpop.f32.mrb[0].mxu0
    %v550 = vadd.f32 0.0, %v549
    %v551 = vpop.f32.mrb[0].mxu0
    %552 = vmatprep.mubr.f32.mxu0 %v268
    %553 = vmatmul.mubr.f32.gmra.mrb[0].mxu0 %v266
    %v554 = vpop.f32.mrb[0].mxu0
    %v555 = vadd.f32 0.0, %v554
    %v556 = vpop.f32.mrb[0].mxu0
    %557 = vmatprep.mubr.f32.mxu0 %v272
    %558 = vmatmul.mubr.f32.gmra.mrb[0].mxu0 %v270
    %v559 = vpop.f32.mrb[0].mxu0
    %v560 = vadd.f32 0.0, %v559
    %v561 = vpop.f32.mrb[0].mxu0
    %562 = vmatprep.mubr.f32.mxu0 %v278
    %563 = vmatmul.mubr.f32.gmra.mrb[0].mxu0 %v276
    %v564 = vpop.f32.mrb[0].mxu0
    %v565 = vadd.f32 0.0, %v564
    %v566 = vpop.f32.mrb[0].mxu0
    %567 = vmatprep.mubr.f32.mxu0 %v282
    %568 = vmatmul.mubr.f32.gmra.mrb[0].mxu0 %v280
    %v569 = vpop.f32.mrb[0].mxu0
    %v570 = vadd.f32 0.0, %v569
    %v571 = vpop.f32.mrb[0].mxu0
    %572 = vmatprep.mubr.f32.mxu0 %v288
    %573 = vmatmul.mubr.f32.gmra.mrb[0].mxu0 %v286
    %v574 = vpop.f32.mrb[0].mxu0
    %v575 = vadd.f32 0.0, %v574
    %v576 = vpop.f32.mrb[0].mxu0
    %577 = vmatprep.mubr.f32.mxu0 %v292
    %578 = vmatmul.mubr.f32.gmra.mrb[0].mxu0 %v290
    %v579 = vpop.f32.mrb[0].mxu0
    %v580 = vadd.f32 0.0, %v579
    %v581 = vpop.f32.mrb[0].mxu0
    %582 = vmatprep.mubr.f32.mxu0 %v298
    %583 = vmatmul.mubr.f32.gmra.mrb[0].mxu0 %v296
    %v584 = vpop.f32.mrb[0].mxu0
    %v585 = vadd.f32 0.0, %v584
    %v586 = vpop.f32.mrb[0].mxu0
    %587 = vmatprep.mubr.f32.mxu0 %v302
    %588 = vmatmul.mubr.f32.gmra.mrb[0].mxu0 %v300
    %v589 = vpop.f32.mrb[0].mxu0
    %v590 = vadd.f32 0.0, %v589
    %v591 = vpop.f32.mrb[0].mxu0
    %592 = vmatprep.mubr.f32.mxu0 %v308
    %593 = vmatmul.mubr.f32.gmra.mrb[0].mxu0 %v306
    %v594 = vpop.f32.mrb[0].mxu0
    %v595 = vadd.f32 0.0, %v594
    %v596 = vpop.f32.mrb[0].mxu0
    %597 = vmatprep.mubr.f32.mxu0 %v312
    %598 = vmatmul.mubr.f32.gmra.mrb[0].mxu0 %v310
    %v599 = vpop.f32.mrb[0].mxu0
    %v600 = vadd.f32 0.0, %v599
    %v601 = vpop.f32.mrb[0].mxu0
    %602 = vmatprep.mubr.f32.mxu0 %v318
    %603 = vmatmul.mubr.f32.gmra.mrb[0].mxu0 %v316
    %v604 = vpop.f32.mrb[0].mxu0
    %v605 = vadd.f32 0.0, %v604
    %v606 = vpop.f32.mrb[0].mxu0
    %607 = vmatprep.mubr.f32.mxu0 %v322
    %608 = vmatmul.mubr.f32.gmra.mrb[0].mxu0 %v320
    %v609 = vpop.f32.mrb[0].mxu0
    %v610 = vadd.f32 0.0, %v609
    %v611 = vpop.f32.mrb[0].mxu0
    %612 = vmatprep.mubr.f32.mxu0 %v328
    %613 = vmatmul.mubr.f32.gmra.mrb[0].mxu0 %v326
    %v614 = vpop.f32.mrb[0].mxu0
    %v615 = vadd.f32 0.0, %v614
    %v616 = vpop.f32.mrb[0].mxu0
    %617 = vmatprep.mubr.f32.mxu0 %v332
    %618 = vmatmul.mubr.f32.gmra.mrb[0].mxu0 %v330
    %v619 = vpop.f32.mrb[0].mxu0
    %v620 = vadd.f32 0.0, %v619
    %v621 = vpop.f32.mrb[0].mxu0
    %622 = vdwg.mxu0
    %623 = vst [vmem:[#allocation9] sm:$0xff] %v545
    %624 = vst [vmem:[#allocation9 + $0x8] sm:$0xff] %v550
    %625 = vst [vmem:[#allocation9 + $0x10] sm:$0xff] %v555
    %626 = vst [vmem:[#allocation9 + $0x18] sm:$0xff] %v560
    %627 = vst [vmem:[#allocation9 + $0x20] sm:$0xff] %v565
    %628 = vst [vmem:[#allocation9 + $0x28] sm:$0xff] %v570
    %629 = vst [vmem:[#allocation9 + $0x30] sm:$0xff] %v575
    %630 = vst [vmem:[#allocation9 + $0x38] sm:$0xff] %v580
    %631 = vst [vmem:[#allocation9 + $0x40] sm:$0xff] %v585
    %632 = vst [vmem:[#allocation9 + $0x48] sm:$0xff] %v590
    %633 = vst [vmem:[#allocation9 + $0x50] sm:$0xff] %v595
    %634 = vst [vmem:[#allocation9 + $0x58] sm:$0xff] %v600
    %635 = vst [vmem:[#allocation9 + $0x60] sm:$0xff] %v605
    %636 = vst [vmem:[#allocation9 + $0x68] sm:$0xff] %v610
    %637 = vst [vmem:[#allocation9 + $0x70] sm:$0xff] %v615
    %638 = vst [vmem:[#allocation9 + $0x78] sm:$0xff] %v620
    %639 = vxpose.xlu0.b32.start [1/16] %v545, 128
    %640 = vxpose.xlu0.b32.cont [2/16] %v550, 128
    %641 = vxpose.xlu0.b32.cont [3/16] %v555, 128
    %642 = vxpose.xlu0.b32.cont [4/16] %v560, 128
    %643 = vxpose.xlu0.b32.cont [5/16] %v565, 128
    %644 = vxpose.xlu0.b32.cont [6/16] %v570, 128
    %645 = vxpose.xlu0.b32.cont [7/16] %v575, 128
    %646 = vxpose.xlu0.b32.cont [8/16] %v580, 128
    %647 = vxpose.xlu0.b32.cont [9/16] %v585, 128
    %648 = vxpose.xlu0.b32.cont [10/16] %v590, 128
    %649 = vxpose.xlu0.b32.cont [11/16] %v595, 128
    %650 = vxpose.xlu0.b32.cont [12/16] %v600, 128
    %651 = vxpose.xlu0.b32.cont [13/16] %v605, 128
    %652 = vxpose.xlu0.b32.cont [14/16] %v610, 128
    %653 = vxpose.xlu0.b32.cont [15/16] %v615, 128
    %654 = vxpose.xlu0.b32.end [16/16] %v620, 128
    %v655 = vpop.trf.xlu0
    %v656 = vpop.trf.xlu0
    %v657 = vpop.trf.xlu0
    %v658 = vpop.trf.xlu0
    %v659 = vpop.trf.xlu0
    %v660 = vpop.trf.xlu0
    %v661 = vpop.trf.xlu0
    %v662 = vpop.trf.xlu0
    %v663 = vpop.trf.xlu0
    %v664 = vpop.trf.xlu0
    %v665 = vpop.trf.xlu0
    %v666 = vpop.trf.xlu0
    %v667 = vpop.trf.xlu0
    %v668 = vpop.trf.xlu0
    %v669 = vpop.trf.xlu0
    %v670 = vpop.trf.xlu0
    %671 = vst [vmem:[#allocation11] sm:$0xff] %v655
    // Predicated region
    $region26: #{tpu_custom_call.1} parent=1 // pred_check
      _
    $region27: #{tpu_custom_call.1} parent=1 // pred_check_branch
      %673 = sbr.rel (0) target = $region29
    $region28: #{tpu_custom_call.1} parent=1 // pred_region
      %s675 = ssub.s32 2048, 2048
      %676 = vsyncadd [#allocation4], %s675
      %s677 = sshll.u32 [#allocation8], 4
      %s678 = int_to_ptr.vmem [resolvable:$true] %s677
      %683 = dma.vmem_to_hbm [thread:$0]  %s678, 2048, %s3, [#allocation4], 128, 128, 8
    $region29: #{tpu_custom_call.1} parent=1 // pred_fallthru
      _
    // Predicated region
    $region30: #{tpu_custom_call.1} parent=1 // pred_check
      _
    $region31: #{tpu_custom_call.1} parent=1 // pred_check_branch
      %685 = sbr.rel (0) target = $region33
    $region32: #{tpu_custom_call.1} parent=1 // pred_region
      %s687 = ssub.s32 2048, 2048
      %688 = vsyncadd [#allocation10], %s687
      %s689 = sshll.u32 [#allocation9], 4
      %s690 = int_to_ptr.vmem [resolvable:$true] %s689
      %695 = dma.vmem_to_hbm [thread:$0]  %s690, 2048, %s4, [#allocation10], 128, 128, 8
    $region33: #{tpu_custom_call.1} parent=1 // pred_fallthru
      _
    // Predicated region
    $region34: #{tpu_custom_call.1} parent=1 // pred_check
      _
    $region35: #{tpu_custom_call.1} parent=1 // pred_check_branch
      %697 = sbr.rel (0) target = $region37
    $region36: #{tpu_custom_call.1} parent=1 // pred_region
      %s699 = ssub.s32 128, 128
      %700 = vsyncadd [#allocation10], %s699
      %s702 = sshll.u32 [#allocation11], 4
      %s703 = int_to_ptr.vmem [resolvable:$true] %s702
      %705 = dma.vmem_to_hbm [thread:$0]  %s703, 128, %s5, [#allocation10]
    $region37: #{tpu_custom_call.1} parent=1 // pred_fallthru
      _
    // Predicated region
    $region38: #{tpu_custom_call.1} parent=1 // pred_check
      _
    $region39: #{tpu_custom_call.1} parent=1 // pred_check_branch
      %707 = sbr.rel (0) target = $region41
    $region40: #{tpu_custom_call.1} parent=1 // pred_region
      %708 = dma.done [#allocation4], 2048
    $region41: #{tpu_custom_call.1} parent=1 // pred_fallthru
      _
    // Predicated region
    $region42: #{tpu_custom_call.1} parent=1 // pred_check
      _
    $region43: #{tpu_custom_call.1} parent=1 // pred_check_branch
      %710 = sbr.rel (0) target = $region45
    $region44: #{tpu_custom_call.1} parent=1 // pred_region
      %711 = dma.done [#allocation10], 2048
    $region45: #{tpu_custom_call.1} parent=1 // pred_fallthru
      _
    // Predicated region
    $region46: #{tpu_custom_call.1} parent=1 // pred_check
      _
    $region47: #{tpu_custom_call.1} parent=1 // pred_check_branch
      %713 = sbr.rel (0) target = $region49
    $region48: #{tpu_custom_call.1} parent=1 // pred_region
      %714 = dma.done [#allocation10], 128
    $region49: #{tpu_custom_call.1} parent=1 // pred_fallthru
      _
    %715 = vsyncpa [#allocation3], 1
    %716 = vsyncpa [#allocation6], 1
    %717 = vsyncpa [#allocation4], 1
    %718 = vsyncpa [#allocation10], 1

</llo_original>
